<compile_context>
chip_gen: v5e
topology: v5e:2x2
jax: 0.10.0
libtpu: 0.0.40
codegen_flags: <defaults>
</compile_context>

<pallas_src>
import jax
import jax.numpy as jnp
from jax.experimental import pallas as pl
from jax.experimental.pallas import tpu as pltpu

HID = 64      # real hidden width (matches nn.Linear(3, 64) / (64, 64))
HIDP = 128    # hidden width padded to one full vreg lane width / MXU tile
INP = 3       # state dim
INP_PAD = 8   # state dim padded to one sublane tile for a clean fc1 dot

FC2_DTYPE = jnp.bfloat16   # MXU input dtype for fc2 (f32 accumulation kept)


def pnetwork_kernel(xt_ref, w1t_ref, b1t_ref, w2t_ref, b2t_ref, w3t_ref, b3_ref, o_ref):
    # Transposed layout: activations are (channels, batch_tile); batch lives on lanes.
    # fc1: (128, 8) @ (8, tb) -> (128, tb).  K padded 3 -> 8 with zeros; negligible MXU work.
    h1t = jnp.dot(w1t_ref[...], xt_ref[...],
                  preferred_element_type=jnp.float32) + b1t_ref[...]
    h1t = jnp.maximum(h1t, 0.0)                     # padded channels: ReLU(0) == 0

    # fc2: the only real MXU tile — 128x128 weights, bf16 inputs, f32 accumulate.
    h2t = jnp.dot(w2t_ref[...], h1t.astype(w2t_ref.dtype),
                  preferred_element_type=jnp.float32) + b2t_ref[...]
    h2t = jnp.maximum(h2t, 0.0)                     # (128, tb)

    # fc3: (1, 128) @ (128, tb) -> (1, tb); bias is a scalar read from SMEM.
    a = jnp.dot(w3t_ref[...], h2t, preferred_element_type=jnp.float32) + b3_ref[0]

    # Lane-dense (1, tb) store — 4 B of HBM writeback per action, no broadcast slab.
    o_ref[...] = (jnp.tanh(a) * 2.0).astype(o_ref.dtype)


def _choose_tb(batch, max_tb=2048):
    """Lane-dim tiles must be a multiple of 128.  Cap at ~B/2 so grid_b >= 2 whenever
    the batch allows it (v7x: both TensorCores get work); otherwise go as big as
    possible (v5e/v6e: fewest, largest tiles amortize the ~0.35 us per-step cost)."""
    half = -(-batch // 2)
    tb = -(-half // 128) * 128
    return max(128, min(max_tb, tb))


def pnetwork_forward(x, prepared_params, *, tb=None, max_tb=2048):
    """x: (B, 3) f32.  Returns (B, 1) f32 actions in [-2, 2]."""
    w1t, b1t, w2t, b2t, w3t, b3 = prepared_params
    B = x.shape[0]
    if tb is None:
        tb = _choose_tb(B, max_tb)
    grid_b = pl.cdiv(B, tb)

    # Lane-dense transposed input: (8, B). Feature pad 3 -> 8 fuses with the transpose;
    # no batch-dim jnp.pad (partial final block handles the ragged tail).
    xt = jnp.pad(x, ((0, 0), (0, INP_PAD - INP))).T

    const = lambda i: (0, 0)   # weights/biases: same block every step -> VMEM-resident

    out = pl.pallas_call(
        pnetwork_kernel,
        out_shape=jax.ShapeDtypeStruct((1, B), jnp.float32),
        grid=(grid_b,),
        in_specs=[
            pl.BlockSpec((INP_PAD, tb), lambda i: (0, i)),      # x^T tile (streamed)
            pl.BlockSpec((HIDP, INP_PAD), const),               # w1^T (128, 8)
            pl.BlockSpec((HIDP, 1), const),                     # b1   (128, 1)
            pl.BlockSpec((HIDP, HIDP), const),                  # w2^T (128, 128) bf16
            pl.BlockSpec((HIDP, 1), const),                     # b2   (128, 1)
            pl.BlockSpec((1, HIDP), const),                     # w3^T (1, 128)
            pl.BlockSpec(memory_space=pltpu.MemorySpace.SMEM),  # b3 scalar in SMEM
        ],
        out_specs=pl.BlockSpec((1, tb), lambda i: (0, i)),      # lane-dense action row
        compiler_params=pltpu.CompilerParams(
            dimension_semantics=("parallel",),                  # v7x: shard tiles across 2 TCs
        ),
    )(xt, w1t, b1t, w2t, b2t, w3t, b3)

    return out.reshape(B, 1)


def prepare_params(raw, *, fc2_dtype=FC2_DTYPE):
    """Transpose + zero-pad parameters for the batch-on-lanes kernel layout."""
    w1, b1, w2, b2, w3, b3 = raw                     # w: (in, out), b: (out,)
    w1t = jnp.pad(w1.T, ((0, HIDP - HID), (0, INP_PAD - INP)))          # (128, 8)
    b1t = jnp.pad(b1.reshape(-1, 1), ((0, HIDP - HID), (0, 0)))         # (128, 1)
    w2t = jnp.pad(w2.T, ((0, HIDP - HID), (0, HIDP - HID))).astype(fc2_dtype)  # (128, 128)
    b2t = jnp.pad(b2.reshape(-1, 1), ((0, HIDP - HID), (0, 0)))         # (128, 1)
    w3t = jnp.pad(w3.T, ((0, 0), (0, HIDP - HID)))                      # (1, 128)
    b3s = b3.reshape(1).astype(jnp.float32)                             # (1,) SMEM scalar
    return w1t, b1t, w2t, b2t, w3t, b3s


def init_params(key):
    """Deterministic init mimicking PyTorch nn.Linear default:
    U(-1/sqrt(fan_in), 1/sqrt(fan_in)).  Weights stored as (in, out)."""
    def linear_init(k, fan_in, fan_out):
        kw, kb = jax.random.split(k)
        bound = float(fan_in) ** -0.5
        w = jax.random.uniform(kw, (fan_in, fan_out), jnp.float32, -bound, bound)
        b = jax.random.uniform(kb, (fan_out,), jnp.float32, -bound, bound)
        return w, b

    k1, k2, k3 = jax.random.split(key, 3)
    w1, b1 = linear_init(k1, INP, HID)
    w2, b2 = linear_init(k2, HID, HID)
    w3, b3 = linear_init(k3, HID, 1)
    raw = (w1, b1, w2, b2, w3, b3)
    return raw, prepare_params(raw)


if __name__ == "__main__":
    key = jax.random.PRNGKey(0)
    kp, kx = jax.random.split(key)
    raw_params, prepared_params = init_params(kp)

    # state batch: (B, 3) — B deliberately NOT a multiple of 128 or of the tile, to
    # exercise the partial final block (no wrapper-side batch padding anymore).
    B = 300
    x = jax.random.normal(kx, (B, INP), dtype=jnp.float32)

    forward = jax.jit(lambda xx: pnetwork_forward(xx, prepared_params))
    out = jax.block_until_ready(forward(x))

    # Pure-JAX f32 reference (HIGHEST precision = the exact module semantics).
    w1, b1, w2, b2, w3, b3 = raw_params
    hi = jax.lax.Precision.HIGHEST
    h1 = jnp.maximum(jnp.dot(x, w1, precision=hi) + b1, 0.0)
    h2 = jnp.maximum(jnp.dot(h1, w2, precision=hi) + b2, 0.0)
    ref = jnp.tanh(jnp.dot(h2, w3, precision=hi) + b3) * 2.0

    assert out.shape == (B, 1), out.shape
    max_err = float(jnp.max(jnp.abs(out - ref)))
    # fc2 uses bf16 MXU inputs with f32 accumulation (64-wide dots): expected max
    # error ~1e-3; 1e-2 gives headroom while still catching real layout/order bugs,
    # which would be orders of magnitude larger.
    atol = 1e-2 if FC2_DTYPE == jnp.bfloat16 else 1e-4
    assert jnp.allclose(out, ref, atol=atol, rtol=0.0), f"mismatch vs reference: {max_err}"
    print("KERNEL_OK")
</pallas_src>

<mosaic_0001>
module attributes {stable_mosaic.version = 11 : i64} {
  func.func @pnetwork_kernel(%arg0: i32, %arg1: memref<8x256xf32, #tpu.memory_space<vmem>>, %arg2: memref<128x8xf32, #tpu.memory_space<vmem>>, %arg3: memref<128x1xf32, #tpu.memory_space<vmem>>, %arg4: memref<128x128xbf16, #tpu.memory_space<vmem>>, %arg5: memref<128x1xf32, #tpu.memory_space<vmem>>, %arg6: memref<1x128xf32, #tpu.memory_space<vmem>>, %arg7: memref<1xf32, #tpu.memory_space<smem>>, %arg8: memref<1x256xf32, #tpu.memory_space<vmem>>) attributes {dimension_semantics = [#tpu.dimension_semantics<parallel>], iteration_bounds = array<i64: 2>, scalar_prefetch = 0 : i64, scratch_operands = 0 : i64, tpu.core_type = #tpu.core_type<tc>, window_params = [{transform_indices = @transform_0, window_bounds = array<i64: 8, 256>}, {pipeline_mode = #tpu.pipeline_mode<synchronous>, transform_indices = @transform_1, window_bounds = array<i64: 128, 8>}, {pipeline_mode = #tpu.pipeline_mode<synchronous>, transform_indices = @transform_2, window_bounds = array<i64: 128, 1>}, {pipeline_mode = #tpu.pipeline_mode<synchronous>, transform_indices = @transform_3, window_bounds = array<i64: 128, 128>}, {pipeline_mode = #tpu.pipeline_mode<synchronous>, transform_indices = @transform_4, window_bounds = array<i64: 128, 1>}, {pipeline_mode = #tpu.pipeline_mode<synchronous>, transform_indices = @transform_5, window_bounds = array<i64: 1, 128>}, {transform_indices = @transform_6, window_bounds = array<i64: 1>}, {transform_indices = @transform_7, window_bounds = array<i64: 1, 256>}]} {
    %c0 = arith.constant 0 : index
    %c0_0 = arith.constant 0 : index
    %0 = vector.load %arg2[%c0, %c0_0] : memref<128x8xf32, #tpu.memory_space<vmem>>, vector<128x8xf32>
    %c0_1 = arith.constant 0 : index
    %c0_2 = arith.constant 0 : index
    %1 = vector.load %arg1[%c0_1, %c0_2] : memref<8x256xf32, #tpu.memory_space<vmem>>, vector<8x256xf32>
    %cst = arith.constant dense<0.000000e+00> : vector<128x256xf32>
    %2 = tpu.matmul %0, %1, %cst {dimension_numbers = #tpu.dot_dimension_numbers<[1], [0], [0], [1], [0, 0, 1, 1], [], []>} : vector<128x8xf32>, vector<8x256xf32>, vector<128x256xf32> -> vector<128x256xf32>
    %c0_3 = arith.constant 0 : index
    %c0_4 = arith.constant 0 : index
    %3 = vector.load %arg3[%c0_3, %c0_4] : memref<128x1xf32, #tpu.memory_space<vmem>>, vector<128x1xf32>
    %4 = vector.broadcast %3 : vector<128x1xf32> to vector<128x256xf32>
    %5 = arith.addf %2, %4 : vector<128x256xf32>
    %cst_5 = arith.constant 0.000000e+00 : f32
    %6 = vector.broadcast %cst_5 : f32 to vector<128x256xf32>
    %7 = arith.maximumf %5, %6 : vector<128x256xf32>
    %c0_6 = arith.constant 0 : index
    %c0_7 = arith.constant 0 : index
    %8 = vector.load %arg4[%c0_6, %c0_7] : memref<128x128xbf16, #tpu.memory_space<vmem>>, vector<128x128xbf16>
    %9 = arith.truncf %7 : vector<128x256xf32> to vector<128x256xbf16>
    %cst_8 = arith.constant dense<0.000000e+00> : vector<128x256xf32>
    %10 = tpu.matmul %8, %9, %cst_8 {dimension_numbers = #tpu.dot_dimension_numbers<[1], [0], [0], [1], [0, 0, 1, 1], [], []>} : vector<128x128xbf16>, vector<128x256xbf16>, vector<128x256xf32> -> vector<128x256xf32>
    %c0_9 = arith.constant 0 : index
    %c0_10 = arith.constant 0 : index
    %11 = vector.load %arg5[%c0_9, %c0_10] : memref<128x1xf32, #tpu.memory_space<vmem>>, vector<128x1xf32>
    %12 = vector.broadcast %11 : vector<128x1xf32> to vector<128x256xf32>
    %13 = arith.addf %10, %12 : vector<128x256xf32>
    %cst_11 = arith.constant 0.000000e+00 : f32
    %14 = vector.broadcast %cst_11 : f32 to vector<128x256xf32>
    %15 = arith.maximumf %13, %14 : vector<128x256xf32>
    %c0_12 = arith.constant 0 : index
    %c0_13 = arith.constant 0 : index
    %16 = vector.load %arg6[%c0_12, %c0_13] : memref<1x128xf32, #tpu.memory_space<vmem>>, vector<1x128xf32>
    %cst_14 = arith.constant dense<0.000000e+00> : vector<1x256xf32>
    %17 = tpu.matmul %16, %15, %cst_14 {dimension_numbers = #tpu.dot_dimension_numbers<[1], [0], [0], [1], [0, 0, 1, 1], [], []>} : vector<1x128xf32>, vector<128x256xf32>, vector<1x256xf32> -> vector<1x256xf32>
    %c0_15 = arith.constant 0 : index
    %18 = memref.load %arg7[%c0_15] : memref<1xf32, #tpu.memory_space<smem>>
    %19 = vector.broadcast %18 : f32 to vector<1x256xf32>
    %20 = arith.addf %17, %19 : vector<1x256xf32>
    %21 = math.tanh %20 : vector<1x256xf32>
    %cst_16 = arith.constant 2.000000e+00 : f32
    %22 = vector.broadcast %cst_16 : f32 to vector<1x256xf32>
    %23 = arith.mulf %21, %22 : vector<1x256xf32>
    %c0_17 = arith.constant 0 : index
    %c0_18 = arith.constant 0 : index
    %24 = vector.load %arg8[%c0_17, %c0_18] : memref<1x256xf32, #tpu.memory_space<vmem>>, vector<1x256xf32>
    tpu.vector_store %arg8[%c0_17, %c0_18], %23 {strides = array<i32>} : memref<1x256xf32, #tpu.memory_space<vmem>>, vector<1x256xf32>,
    return
  }
  func.func @transform_0(%arg0: i32) -> (i32, i32) {
    %c0_i32 = arith.constant 0 : i32
    %c0_i32_0 = arith.constant 0 : i32
    return %c0_i32, %arg0 : i32, i32
  }
  func.func @transform_1(%arg0: i32) -> (i32, i32) {
    %c0_i32 = arith.constant 0 : i32
    %c0_i32_0 = arith.constant 0 : i32
    %c0_i32_1 = arith.constant 0 : i32
    return %c0_i32, %c0_i32_0 : i32, i32
  }
  func.func @transform_2(%arg0: i32) -> (i32, i32) {
    %c0_i32 = arith.constant 0 : i32
    %c0_i32_0 = arith.constant 0 : i32
    %c0_i32_1 = arith.constant 0 : i32
    return %c0_i32, %c0_i32_0 : i32, i32
  }
  func.func @transform_3(%arg0: i32) -> (i32, i32) {
    %c0_i32 = arith.constant 0 : i32
    %c0_i32_0 = arith.constant 0 : i32
    %c0_i32_1 = arith.constant 0 : i32
    return %c0_i32, %c0_i32_0 : i32, i32
  }
  func.func @transform_4(%arg0: i32) -> (i32, i32) {
    %c0_i32 = arith.constant 0 : i32
    %c0_i32_0 = arith.constant 0 : i32
    %c0_i32_1 = arith.constant 0 : i32
    return %c0_i32, %c0_i32_0 : i32, i32
  }
  func.func @transform_5(%arg0: i32) -> (i32, i32) {
    %c0_i32 = arith.constant 0 : i32
    %c0_i32_0 = arith.constant 0 : i32
    %c0_i32_1 = arith.constant 0 : i32
    return %c0_i32, %c0_i32_0 : i32, i32
  }
  func.func @transform_6(%arg0: i32) -> i32 {
    %c0_i32 = arith.constant 0 : i32
    %c0_i32_0 = arith.constant 0 : i32
    return %c0_i32 : i32
  }
  func.func @transform_7(%arg0: i32) -> (i32, i32) {
    %c0_i32 = arith.constant 0 : i32
    %c0_i32_0 = arith.constant 0 : i32
    return %c0_i32, %arg0 : i32, i32
  }
}

</mosaic_0001>

<llo_original>
// kernel: _lambda_.1
$region0: #{_lambda_.1}
  #allocation0 [shape = 'u32[]', space=smem, size = 0x4, offset = 0x4, fixed_abs, tag = 'smem constant byte address 0x4 - core index']
  #allocation1 [shape = 'u32[72,128]{1,0:T(1,128)}', space=vmem, size = 0x9000, scoped, tag = 'internal scratch']
  #allocation2 [shape = 'f32[1]{0:T(128)S(6)}', space=smem, size = 0x200, scoped, tag = 'scoped memory for _lambda_.1']
  %s0 = inlined_call_operand.vmem [shape: f32[8,300], index: 0, kind: input, shape index: {}]
  %s1 = inlined_call_operand.hbm [shape: f32[128,8], index: 1, kind: input, shape index: {}]
  %s2 = inlined_call_operand.hbm [shape: f32[128,1], index: 2, kind: input, shape index: {}]
  %s3 = inlined_call_operand.hbm [shape: bf16[128,128], index: 3, kind: input, shape index: {}]
  %s4 = inlined_call_operand.hbm [shape: f32[128,1], index: 4, kind: input, shape index: {}]
  %s5 = inlined_call_operand.vmem [shape: f32[1,128], index: 5, kind: input, shape index: {}]
  %s6 = inlined_call_operand.<no memory space> [shape: f32[1], index: 6, kind: input, shape index: {}]
  %s7 = inlined_call_operand.hbm [shape: f32[1,300], index: 7, kind: output, shape index: {}]
  %s8 = sld [smem:[#allocation0]]
  $region77: #{_lambda_.1} parent=0
    _
  %s10 = ssub.s32 1, %s8
  %s11 = scalar_select 0, %s10, %s8
  %12 = sst [smem:[#allocation2]] %s6
  $region1: #{_lambda_.1} parent=0
    #allocation3 [shape = 'u8[65536]{0}', space=vmem, size = 0x10000, scoped, tag = 'input window, operand 1, single buffered']
    #allocation4 [shape = 's32[2]{0}', space=sflag, size = 0x8, scoped, tag = 'scoped memory for _lambda_.1']
    #allocation5 [shape = 's32[2]{0}', space=sflag, size = 0x8, scoped, tag = 'scoped memory for _lambda_.1']
    #allocation6 [shape = 'u8[65536]{0}', space=vmem, size = 0x10000, scoped, tag = 'input window, operand 2, single buffered']
    #allocation7 [shape = 's32[1]{0}', space=sflag, size = 0x4, scoped, tag = 'scoped memory for _lambda_.1']
    #allocation8 [shape = 'u8[32768]{0}', space=vmem, size = 0x8000, scoped, tag = 'input window, operand 3, single buffered']
    #allocation9 [shape = 'u8[65536]{0}', space=vmem, size = 0x10000, scoped, tag = 'input window, operand 4, single buffered']
    #allocation10 [shape = 's32[1]{0}', space=sflag, size = 0x4, scoped, tag = 'scoped memory for _lambda_.1']
    #allocation11 [shape = 'u8[2048]{0}', space=vmem, size = 0x800, scoped, tag = 'output window, operand 0']
    %13 = vsyncpa [#allocation4], 0
    %14 = vsyncpa [#allocation7], 0
    %15 = vsyncpa [#allocation10], 0
    %16 = vsyncpa [#allocation5], 0
    %s17 = scalar_lea.sflag [#allocation5], 1
    %18 = vsyncpa %s17, 0
    loop: start=0, step=1, limit=4
    $region2: #{_lambda_.1} parent=1 // loop_pre_header
      _
    $region3: #{_lambda_.1} parent=1 // loop_header
      %s20 = sphi 0, %s24
      %p21 = scmp.ge.s32.totalorder %s20, 4
      %s30 = sphi 0, %s32
      %s33 = sphi 0, %s30
      %s34 = sphi 0, %s33
      %s50 = sphi 0, %s34
      %s54 = sphi 0, %s54
      %s56 = sphi 0, %s54
      %s57 = sphi 0, %s56
      %s71 = sphi 0, %s57
      %s75 = sphi 0, %s75
      %s77 = sphi 0, %s75
      %s78 = sphi 0, %s77
      %s92 = sphi 0, %s78
      %s96 = sphi 0, %s96
      %s98 = sphi 0, %s96
      %s99 = sphi 0, %s98
      %s113 = sphi 0, %s99
      %s117 = sphi 0, %s117
      %s119 = sphi 0, %s117
      %s120 = sphi 0, %s119
      %s134 = sphi 0, %s120
      %s138 = sphi 0, %s138
      %s140 = sphi 0, %s138
      %s141 = sphi 0, %s140
      %s155 = sphi 0, %s141
      %s159 = sphi 0, %s159
      %s161 = sphi 0, %s159
      %s162 = sphi 0, %s161
      %s176 = sphi 0, %s162
      %s182 = sphi 0, %s184
      %s185 = sphi 0, %s182
      %s186 = sphi 0, %s185
      %s202 = sphi 0, %s186
    $region4: #{_lambda_.1} parent=1 // loop_header_branch
      %23 = sbr.rel (%p21) target = $region8
    $region5: #{_lambda_.1} parent=1 // loop_body
      %s25 = ssub.s32 %s20, 1
      %s26 = ssub.s32 %s20, 2
      %s27 = sadd.s32 %s20, 1
      %s28 = ssub.s32 %s20, %s27
      %p29 = scmp.eq.s32.totalorder %s28, 0
      %s31 = sadd.s32 %s30, 1
      %s32 = scalar_select %p29, %s30, %s31
      %p35 = pneg %p29
      %p36 = scmp.eq.s32.totalorder %s20, 1
      %p37 = por %p35, %p36
      %p38 = scmp.ne.s32.totalorder %s30, %s33
      %p39 = scmp.eq.s32.totalorder %s20, 0
      %p40 = por %p38, %p39
      %p41 = scmp.ne.s32.totalorder %s30, %s33
      %p42 = scmp.eq.s32.totalorder %s25, 1
      %p43 = por %p41, %p42
      %p44 = scmp.ne.s32.totalorder %s33, %s34
      %p45 = scmp.eq.s32.totalorder %s25, 0
      %p46 = por %p44, %p45
      %p47 = scmp.ne.s32.totalorder %s33, %s34
      %p48 = scmp.eq.s32.totalorder %s26, 1
      %p49 = por %p47, %p48
      %p51 = scmp.ne.s32.totalorder %s34, %s50
      %p52 = scmp.eq.s32.totalorder %s26, 0
      %p53 = por %p51, %p52
      %s55 = sadd.s32 %s54, 1
      %p58 = scmp.eq.s32.totalorder %s20, 1
      %p59 = scmp.ne.s32.totalorder %s54, %s56
      %p60 = scmp.eq.s32.totalorder %s20, 0
      %p61 = por %p59, %p60
      %p62 = scmp.ne.s32.totalorder %s54, %s56
      %p63 = scmp.eq.s32.totalorder %s25, 1
      %p64 = por %p62, %p63
      %p65 = scmp.ne.s32.totalorder %s56, %s57
      %p66 = scmp.eq.s32.totalorder %s25, 0
      %p67 = por %p65, %p66
      %p68 = scmp.ne.s32.totalorder %s56, %s57
      %p69 = scmp.eq.s32.totalorder %s26, 1
      %p70 = por %p68, %p69
      %p72 = scmp.ne.s32.totalorder %s57, %s71
      %p73 = scmp.eq.s32.totalorder %s26, 0
      %p74 = por %p72, %p73
      %s76 = sadd.s32 %s75, 1
      %p79 = scmp.eq.s32.totalorder %s20, 1
      %p80 = scmp.ne.s32.totalorder %s75, %s77
      %p81 = scmp.eq.s32.totalorder %s20, 0
      %p82 = por %p80, %p81
      %p83 = scmp.ne.s32.totalorder %s75, %s77
      %p84 = scmp.eq.s32.totalorder %s25, 1
      %p85 = por %p83, %p84
      %p86 = scmp.ne.s32.totalorder %s77, %s78
      %p87 = scmp.eq.s32.totalorder %s25, 0
      %p88 = por %p86, %p87
      %p89 = scmp.ne.s32.totalorder %s77, %s78
      %p90 = scmp.eq.s32.totalorder %s26, 1
      %p91 = por %p89, %p90
      %p93 = scmp.ne.s32.totalorder %s78, %s92
      %p94 = scmp.eq.s32.totalorder %s26, 0
      %p95 = por %p93, %p94
      %s97 = sadd.s32 %s96, 1
      %p100 = scmp.eq.s32.totalorder %s20, 1
      %p101 = scmp.ne.s32.totalorder %s96, %s98
      %p102 = scmp.eq.s32.totalorder %s20, 0
      %p103 = por %p101, %p102
      %p104 = scmp.ne.s32.totalorder %s96, %s98
      %p105 = scmp.eq.s32.totalorder %s25, 1
      %p106 = por %p104, %p105
      %p107 = scmp.ne.s32.totalorder %s98, %s99
      %p108 = scmp.eq.s32.totalorder %s25, 0
      %p109 = por %p107, %p108
      %p110 = scmp.ne.s32.totalorder %s98, %s99
      %p111 = scmp.eq.s32.totalorder %s26, 1
      %p112 = por %p110, %p111
      %p114 = scmp.ne.s32.totalorder %s99, %s113
      %p115 = scmp.eq.s32.totalorder %s26, 0
      %p116 = por %p114, %p115
      %s118 = sadd.s32 %s117, 1
      %p121 = scmp.eq.s32.totalorder %s20, 1
      %p122 = scmp.ne.s32.totalorder %s117, %s119
      %p123 = scmp.eq.s32.totalorder %s20, 0
      %p124 = por %p122, %p123
      %p125 = scmp.ne.s32.totalorder %s117, %s119
      %p126 = scmp.eq.s32.totalorder %s25, 1
      %p127 = por %p125, %p126
      %p128 = scmp.ne.s32.totalorder %s119, %s120
      %p129 = scmp.eq.s32.totalorder %s25, 0
      %p130 = por %p128, %p129
      %p131 = scmp.ne.s32.totalorder %s119, %s120
      %p132 = scmp.eq.s32.totalorder %s26, 1
      %p133 = por %p131, %p132
      %p135 = scmp.ne.s32.totalorder %s120, %s134
      %p136 = scmp.eq.s32.totalorder %s26, 0
      %p137 = por %p135, %p136
      %s139 = sadd.s32 %s138, 1
      %p142 = scmp.eq.s32.totalorder %s20, 1
      %p143 = scmp.ne.s32.totalorder %s138, %s140
      %p144 = scmp.eq.s32.totalorder %s20, 0
      %p145 = por %p143, %p144
      %p146 = scmp.ne.s32.totalorder %s138, %s140
      %p147 = scmp.eq.s32.totalorder %s25, 1
      %p148 = por %p146, %p147
      %p149 = scmp.ne.s32.totalorder %s140, %s141
      %p150 = scmp.eq.s32.totalorder %s25, 0
      %p151 = por %p149, %p150
      %p152 = scmp.ne.s32.totalorder %s140, %s141
      %p153 = scmp.eq.s32.totalorder %s26, 1
      %p154 = por %p152, %p153
      %p156 = scmp.ne.s32.totalorder %s141, %s155
      %p157 = scmp.eq.s32.totalorder %s26, 0
      %p158 = por %p156, %p157
      %s160 = sadd.s32 %s159, 1
      %p163 = scmp.eq.s32.totalorder %s20, 1
      %p164 = scmp.ne.s32.totalorder %s159, %s161
      %p165 = scmp.eq.s32.totalorder %s20, 0
      %p166 = por %p164, %p165
      %p167 = scmp.ne.s32.totalorder %s159, %s161
      %p168 = scmp.eq.s32.totalorder %s25, 1
      %p169 = por %p167, %p168
      %p170 = scmp.ne.s32.totalorder %s161, %s162
      %p171 = scmp.eq.s32.totalorder %s25, 0
      %p172 = por %p170, %p171
      %p173 = scmp.ne.s32.totalorder %s161, %s162
      %p174 = scmp.eq.s32.totalorder %s26, 1
      %p175 = por %p173, %p174
      %p177 = scmp.ne.s32.totalorder %s162, %s176
      %p178 = scmp.eq.s32.totalorder %s26, 0
      %p179 = por %p177, %p178
      %s180 = ssub.s32 %s20, %s27
      %p181 = scmp.eq.s32.totalorder %s180, 0
      %s183 = sadd.s32 %s182, 1
      %s184 = scalar_select %p181, %s182, %s183
      %p187 = pneg %p181
      %p188 = scmp.eq.s32.totalorder %s20, 1
      %p189 = por %p187, %p188
      %p190 = scmp.ne.s32.totalorder %s182, %s185
      %p191 = scmp.eq.s32.totalorder %s20, 0
      %p192 = por %p190, %p191
      %p193 = scmp.ne.s32.totalorder %s182, %s185
      %p194 = scmp.eq.s32.totalorder %s25, 1
      %p195 = por %p193, %p194
      %p196 = scmp.ne.s32.totalorder %s185, %s186
      %p197 = scmp.eq.s32.totalorder %s25, 0
      %p198 = por %p196, %p197
      %p199 = scmp.ne.s32.totalorder %s185, %s186
      %p200 = scmp.eq.s32.totalorder %s26, 1
      %p201 = por %p199, %p200
      %p203 = scmp.ne.s32.totalorder %s186, %s202
      %p204 = scmp.eq.s32.totalorder %s26, 0
      %p205 = por %p203, %p204
      %p206 = scmp.le.s32.totalorder 1, %s20
      %p207 = scmp.lt.s32.totalorder %s20, 3
      %p208 = pnand %p206, %p207
      %p209 = pneg %p208
      // Predicated region
      $region9: #{_lambda_.1} parent=5 // pred_check
        _
      $region10: #{_lambda_.1} parent=5 // pred_check_branch
        %211 = sbr.rel (%p208) target = $region12
      $region11: #{_lambda_.1} parent=5 // pred_region
        %s212 = ssub.s32 %s20, 1
        // Predicated region
        $region13: #{_lambda_.1} parent=11 // pred_check
          %p213 = pneg %p67
        $region14: #{_lambda_.1} parent=11 // pred_check_branch
          %215 = sbr.rel (%p213) target = $region16
        $region15: #{_lambda_.1} parent=11 // pred_region
          %217 = vsyncadd [#allocation4], 0
          %s218 = sshll.u32 %s1, 4
          %s219 = int_to_ptr.hbm [resolvable:$true] %s218
          %s220 = sshll.u32 [#allocation3], 4
          %s221 = int_to_ptr.vmem [resolvable:$true] %s220
          %226 = dma.hbm_to_vmem [thread:$0]  %s219, 2048, %s221, [#allocation4], 128, 128, 8
        $region16: #{_lambda_.1} parent=11 // pred_fallthru
          _
        // Predicated region
        $region17: #{_lambda_.1} parent=11 // pred_check
          %p227 = pneg %p88
        $region18: #{_lambda_.1} parent=11 // pred_check_branch
          %229 = sbr.rel (%p227) target = $region20
        $region19: #{_lambda_.1} parent=11 // pred_region
          %231 = vsyncadd [#allocation7], 0
          %s232 = sshll.u32 %s2, 4
          %s233 = int_to_ptr.hbm [resolvable:$true] %s232
          %s234 = sshll.u32 [#allocation6], 4
          %s235 = int_to_ptr.vmem [resolvable:$true] %s234
          %240 = dma.hbm_to_vmem [thread:$0]  %s233, 2048, %s235, [#allocation7], 128, 128, 8
        $region20: #{_lambda_.1} parent=11 // pred_fallthru
          _
        // Predicated region
        $region21: #{_lambda_.1} parent=11 // pred_check
          %p241 = pneg %p109
        $region22: #{_lambda_.1} parent=11 // pred_check_branch
          %243 = sbr.rel (%p241) target = $region24
        $region23: #{_lambda_.1} parent=11 // pred_region
          %245 = vsyncadd [#allocation7], 0
          %s246 = sshll.u32 %s3, 4
          %s247 = int_to_ptr.hbm [resolvable:$true] %s246
          %s248 = sshll.u32 [#allocation8], 4
          %s249 = int_to_ptr.vmem [resolvable:$true] %s248
          %254 = dma.hbm_to_vmem [thread:$0]  %s247, 1024, %s249, [#allocation7], 64, 64, 4
        $region24: #{_lambda_.1} parent=11 // pred_fallthru
          _
        // Predicated region
        $region25: #{_lambda_.1} parent=11 // pred_check
          %p255 = pneg %p130
        $region26: #{_lambda_.1} parent=11 // pred_check_branch
          %257 = sbr.rel (%p255) target = $region28
        $region27: #{_lambda_.1} parent=11 // pred_region
          %259 = vsyncadd [#allocation10], 0
          %s260 = sshll.u32 %s4, 4
          %s261 = int_to_ptr.hbm [resolvable:$true] %s260
          %s262 = sshll.u32 [#allocation9], 4
          %s263 = int_to_ptr.vmem [resolvable:$true] %s262
          %268 = dma.hbm_to_vmem [thread:$0]  %s261, 2048, %s263, [#allocation10], 128, 128, 8
        $region28: #{_lambda_.1} parent=11 // pred_fallthru
          _
        // Predicated region
        $region29: #{_lambda_.1} parent=11 // pred_check
          %p269 = pneg %p151
        $region30: #{_lambda_.1} parent=11 // pred_check_branch
          %271 = sbr.rel (%p269) target = $region32
        $region31: #{_lambda_.1} parent=11 // pred_region
          _
        $region32: #{_lambda_.1} parent=11 // pred_fallthru
          _
        // Predicated region
        $region33: #{_lambda_.1} parent=11 // pred_check
          %p272 = pneg %p172
        $region34: #{_lambda_.1} parent=11 // pred_check_branch
          %274 = sbr.rel (%p272) target = $region36
        $region35: #{_lambda_.1} parent=11 // pred_region
          _
        $region36: #{_lambda_.1} parent=11 // pred_fallthru
          _
      $region12: #{_lambda_.1} parent=5 // pred_fallthru
        _
      %p275 = scmp.lt.s32.totalorder %s20, 2
      // Predicated region
      $region37: #{_lambda_.1} parent=5 // pred_check
        %p276 = pneg %p275
      $region38: #{_lambda_.1} parent=5 // pred_check_branch
        %278 = sbr.rel (%p276) target = $region40
      $region39: #{_lambda_.1} parent=5 // pred_region
        // Predicated region
        $region41: #{_lambda_.1} parent=39 // pred_check
          %p279 = pneg %p40
        $region42: #{_lambda_.1} parent=39 // pred_check_branch
          %281 = sbr.rel (%p279) target = $region44
        $region43: #{_lambda_.1} parent=39 // pred_region
          %s282 = smul.u32 2, %s20
          %s283 = ssub.s32 3, %s282
          %p284 = scmp.lt.s32.totalorder %s283, 2
          %s285 = scalar_select %p284, %s283, 2
          %s286 = smul.u32 8, %s285
          %p287 = scmp.lt.s32.totalorder %s282, 2
          %s288 = scalar_select %p287, %s282, 2
          %s289 = smul.addr %s288, 8
          %s290 = scalar_lea.vmem %s0, %s289
          %s291 = smul.u32 2, %s20
          %s292 = ssub.s32 3, %s291
          %p293 = scmp.lt.s32.totalorder %s292, 2
          %s294 = scalar_select %p293, %s292, 2
          %s295 = smul.u32 8, %s294
        $region44: #{_lambda_.1} parent=39 // pred_fallthru
          _
      $region40: #{_lambda_.1} parent=5 // pred_fallthru
        _
      %p296 = scmp.le.s32.totalorder 1, %s20
      %p297 = scmp.lt.s32.totalorder %s20, 3
      %p298 = pnand %p296, %p297
      %p299 = pneg %p298
      // Predicated region
      $region45: #{_lambda_.1} parent=5 // pred_check
        _
      $region46: #{_lambda_.1} parent=5 // pred_check_branch
        %301 = sbr.rel (%p298) target = $region48
      $region47: #{_lambda_.1} parent=5 // pred_region
        %s302 = ssub.s32 %s20, 1
        // Predicated region
        $region49: #{_lambda_.1} parent=47 // pred_check
          %p303 = pneg %p67
        $region50: #{_lambda_.1} parent=47 // pred_check_branch
          %305 = sbr.rel (%p303) target = $region52
        $region51: #{_lambda_.1} parent=47 // pred_region
          %307 = dma.done [#allocation4], 2048
        $region52: #{_lambda_.1} parent=47 // pred_fallthru
          _
        // Predicated region
        $region53: #{_lambda_.1} parent=47 // pred_check
          %p308 = pneg %p88
        $region54: #{_lambda_.1} parent=47 // pred_check_branch
          %310 = sbr.rel (%p308) target = $region56
        $region55: #{_lambda_.1} parent=47 // pred_region
          %312 = dma.done [#allocation7], 2048
        $region56: #{_lambda_.1} parent=47 // pred_fallthru
          _
        // Predicated region
        $region57: #{_lambda_.1} parent=47 // pred_check
          %p313 = pneg %p109
        $region58: #{_lambda_.1} parent=47 // pred_check_branch
          %315 = sbr.rel (%p313) target = $region60
        $region59: #{_lambda_.1} parent=47 // pred_region
          %317 = dma.done [#allocation7], 1024
        $region60: #{_lambda_.1} parent=47 // pred_fallthru
          _
        // Predicated region
        $region61: #{_lambda_.1} parent=47 // pred_check
          %p318 = pneg %p130
        $region62: #{_lambda_.1} parent=47 // pred_check_branch
          %320 = sbr.rel (%p318) target = $region64
        $region63: #{_lambda_.1} parent=47 // pred_region
          %322 = dma.done [#allocation10], 2048
        $region64: #{_lambda_.1} parent=47 // pred_fallthru
          _
        %s323 = smul.u32 2, %s25
        %s324 = ssub.s32 3, %s323
        %p325 = scmp.lt.s32.totalorder %s324, 2
        %s326 = scalar_select %p325, %s324, 2
        %s327 = smul.u32 8, %s326
        %p328 = scmp.lt.s32.totalorder %s323, 2
        %s329 = scalar_select %p328, %s323, 2
        %s330 = smul.addr %s329, 8
        %s331 = scalar_lea.vmem %s0, %s330
        %p332 = pneg %p46
        %p333 = pneg %p43
        %p334 = pneg %p67
        %p335 = pneg %p64
        %p336 = pneg %p88
        %p337 = pneg %p85
        %p338 = pneg %p109
        %p339 = pneg %p106
        %p340 = pneg %p130
        %p341 = pneg %p127
        %p342 = pneg %p151
        %p343 = pneg %p148
        %p344 = pneg %p172
        %p345 = pneg %p169
        %p346 = pneg %p198
        %p347 = pneg %p195
        %s348 = sand.u32 %s185, 1
        %s349 = scalar_lea.sflag [#allocation5], %s348
        %s350 = sand.u32 %s185, 1
        %s351 = smul.addr %s350, 2
        %s352 = scalar_lea.vmem [#allocation11], %s351
        %s353 = smul.u32 2, %s25
        %s354 = ssub.s32 3, %s353
        %p355 = scmp.lt.s32.totalorder %s354, 2
        %s356 = scalar_select %p355, %s354, 2
        %s357 = smul.u32 8, %s356
        %p358 = scmp.lt.s32.totalorder %s353, 2
        %s359 = scalar_select %p358, %s353, 2
        %s360 = smul.addr %s359, 8
        %s361 = scalar_lea.vmem %s0, %s360
        %s362 = smul.u32 2, %s25
        %s363 = ssub.s32 3, %s362
        %p364 = scmp.lt.s32.totalorder %s363, 2
        %s365 = scalar_select %p364, %s363, 2
        %s366 = smul.u32 8, %s365
        %s367 = smul.u32 2, %s25
        %s368 = ssub.s32 3, %s367
        %p369 = scmp.lt.s32.totalorder %s368, 2
        %s370 = scalar_select %p369, %s368, 2
        %v371 = vld [vmem:[#allocation3] sm:$0xff]
        %v372 = vld [vmem:[#allocation3 + $0x8] sm:$0xff]
        %v373 = vld [vmem:[#allocation3 + $0x10] sm:$0xff]
        %v374 = vld [vmem:[#allocation3 + $0x18] sm:$0xff]
        %v375 = vld [vmem:[#allocation3 + $0x20] sm:$0xff]
        %v376 = vld [vmem:[#allocation3 + $0x28] sm:$0xff]
        %v377 = vld [vmem:[#allocation3 + $0x30] sm:$0xff]
        %v378 = vld [vmem:[#allocation3 + $0x38] sm:$0xff]
        %v379 = vld [vmem:[#allocation3 + $0x40] sm:$0xff]
        %v380 = vld [vmem:[#allocation3 + $0x48] sm:$0xff]
        %v381 = vld [vmem:[#allocation3 + $0x50] sm:$0xff]
        %v382 = vld [vmem:[#allocation3 + $0x58] sm:$0xff]
        %v383 = vld [vmem:[#allocation3 + $0x60] sm:$0xff]
        %v384 = vld [vmem:[#allocation3 + $0x68] sm:$0xff]
        %v385 = vld [vmem:[#allocation3 + $0x70] sm:$0xff]
        %v386 = vld [vmem:[#allocation3 + $0x78] sm:$0xff]
        %v387 = vld [vmem:[%s361] sm:$0xff]
        %v388 = vld [vmem:[%s361 + $0x8] sm:$0xff]
        %v389 = vld [vmem:[#allocation6] sm:$0xff]
        %v390 = vld [vmem:[#allocation6 + $0x8] sm:$0xff]
        %v391 = vld [vmem:[#allocation6 + $0x10] sm:$0xff]
        %v392 = vld [vmem:[#allocation6 + $0x18] sm:$0xff]
        %v393 = vld [vmem:[#allocation6 + $0x20] sm:$0xff]
        %v394 = vld [vmem:[#allocation6 + $0x28] sm:$0xff]
        %v395 = vld [vmem:[#allocation6 + $0x30] sm:$0xff]
        %v396 = vld [vmem:[#allocation6 + $0x38] sm:$0xff]
        %v397 = vld [vmem:[#allocation6 + $0x40] sm:$0xff]
        %v398 = vld [vmem:[#allocation6 + $0x48] sm:$0xff]
        %v399 = vld [vmem:[#allocation6 + $0x50] sm:$0xff]
        %v400 = vld [vmem:[#allocation6 + $0x58] sm:$0xff]
        %v401 = vld [vmem:[#allocation6 + $0x60] sm:$0xff]
        %v402 = vld [vmem:[#allocation6 + $0x68] sm:$0xff]
        %v403 = vld [vmem:[#allocation6 + $0x70] sm:$0xff]
        %v404 = vld [vmem:[#allocation6 + $0x78] sm:$0xff]
        %406 = vset.pattern.permute.xlu0 0
        %407 = vperm.xlu0 %406, %v389
        %v408 = vpop.permute.xlu0 %407
        %411 = vset.pattern.permute.xlu0 0
        %412 = vperm.xlu0 %411, %v390
        %v413 = vpop.permute.xlu0 %412
        %416 = vset.pattern.permute.xlu0 0
        %417 = vperm.xlu0 %416, %v391
        %v418 = vpop.permute.xlu0 %417
        %421 = vset.pattern.permute.xlu0 0
        %422 = vperm.xlu0 %421, %v392
        %v423 = vpop.permute.xlu0 %422
        %426 = vset.pattern.permute.xlu0 0
        %427 = vperm.xlu0 %426, %v393
        %v428 = vpop.permute.xlu0 %427
        %431 = vset.pattern.permute.xlu0 0
        %432 = vperm.xlu0 %431, %v394
        %v433 = vpop.permute.xlu0 %432
        %436 = vset.pattern.permute.xlu0 0
        %437 = vperm.xlu0 %436, %v395
        %v438 = vpop.permute.xlu0 %437
        %441 = vset.pattern.permute.xlu0 0
        %442 = vperm.xlu0 %441, %v396
        %v443 = vpop.permute.xlu0 %442
        %446 = vset.pattern.permute.xlu0 0
        %447 = vperm.xlu0 %446, %v397
        %v448 = vpop.permute.xlu0 %447
        %451 = vset.pattern.permute.xlu0 0
        %452 = vperm.xlu0 %451, %v398
        %v453 = vpop.permute.xlu0 %452
        %456 = vset.pattern.permute.xlu0 0
        %457 = vperm.xlu0 %456, %v399
        %v458 = vpop.permute.xlu0 %457
        %461 = vset.pattern.permute.xlu0 0
        %462 = vperm.xlu0 %461, %v400
        %v463 = vpop.permute.xlu0 %462
        %466 = vset.pattern.permute.xlu0 0
        %467 = vperm.xlu0 %466, %v401
        %v468 = vpop.permute.xlu0 %467
        %471 = vset.pattern.permute.xlu0 0
        %472 = vperm.xlu0 %471, %v402
        %v473 = vpop.permute.xlu0 %472
        %476 = vset.pattern.permute.xlu0 0
        %477 = vperm.xlu0 %476, %v403
        %v478 = vpop.permute.xlu0 %477
        %481 = vset.pattern.permute.xlu0 0
        %482 = vperm.xlu0 %481, %v404
        %v483 = vpop.permute.xlu0 %482
        %vm485 = vcmask 64512
        %v487 = vsel %vm485, %v371, 0
        %v490 = vsel %vm485, %v372, 0
        %v493 = vsel %vm485, %v373, 0
        %v496 = vsel %vm485, %v374, 0
        %v499 = vsel %vm485, %v375, 0
        %v502 = vsel %vm485, %v376, 0
        %v505 = vsel %vm485, %v377, 0
        %v508 = vsel %vm485, %v378, 0
        %v511 = vsel %vm485, %v379, 0
        %v514 = vsel %vm485, %v380, 0
        %v517 = vsel %vm485, %v381, 0
        %v520 = vsel %vm485, %v382, 0
        %v523 = vsel %vm485, %v383, 0
        %v526 = vsel %vm485, %v384, 0
        %v529 = vsel %vm485, %v385, 0
        %v532 = vsel %vm485, %v386, 0
        %534 = vmatpush.msra.mxu0 0.0
        %535 = vmatpush.msra.mxu0 0.0
        %536 = vmatpush.msra.mxu0 0.0
        %537 = vmatpush.msra.mxu0 0.0
        %538 = vmatpush.msra.mxu0 0.0
        %539 = vmatpush.msra.mxu0 0.0
        %540 = vmatpush.msra.mxu0 0.0
        %541 = vmatpush.msra.mxu0 0.0
        %542 = vmatpush.msra.mxu0 0.0
        %543 = vmatpush.msra.mxu0 0.0
        %544 = vmatpush.msra.mxu0 0.0
        %545 = vmatpush.msra.mxu0 0.0
        %546 = vmatpush.msra.mxu0 0.0
        %547 = vmatpush.msra.mxu0 0.0
        %548 = vmatpush.msra.mxu0 0.0
        %549 = vmatpush.msra.mxu0 %v387
        %550 = vmatmul.f32.gmra.mxu0 %v487
        %v551 = vpop.f32.mrf.mxu0
        %v552 = vadd.f32 %v408, %v551
        %553 = vmatmul.f32.gmra.mxu0 %v490
        %v554 = vpop.f32.mrf.mxu0
        %v555 = vadd.f32 %v413, %v554
        %556 = vmatmul.f32.gmra.mxu0 %v493
        %v557 = vpop.f32.mrf.mxu0
        %v558 = vadd.f32 %v418, %v557
        %559 = vmatmul.f32.gmra.mxu0 %v496
        %v560 = vpop.f32.mrf.mxu0
        %v561 = vadd.f32 %v423, %v560
        %562 = vmatmul.f32.gmra.mxu0 %v499
        %v563 = vpop.f32.mrf.mxu0
        %v564 = vadd.f32 %v428, %v563
        %565 = vmatmul.f32.gmra.mxu0 %v502
        %v566 = vpop.f32.mrf.mxu0
        %v567 = vadd.f32 %v433, %v566
        %568 = vmatmul.f32.gmra.mxu0 %v505
        %v569 = vpop.f32.mrf.mxu0
        %v570 = vadd.f32 %v438, %v569
        %571 = vmatmul.f32.gmra.mxu0 %v508
        %v572 = vpop.f32.mrf.mxu0
        %v573 = vadd.f32 %v443, %v572
        %574 = vmatmul.f32.gmra.mxu0 %v511
        %v575 = vpop.f32.mrf.mxu0
        %v576 = vadd.f32 %v448, %v575
        %577 = vmatmul.f32.gmra.mxu0 %v514
        %v578 = vpop.f32.mrf.mxu0
        %v579 = vadd.f32 %v453, %v578
        %580 = vmatmul.f32.gmra.mxu0 %v517
        %v581 = vpop.f32.mrf.mxu0
        %v582 = vadd.f32 %v458, %v581
        %583 = vmatmul.f32.gmra.mxu0 %v520
        %v584 = vpop.f32.mrf.mxu0
        %v585 = vadd.f32 %v463, %v584
        %586 = vmatmul.f32.gmra.mxu0 %v523
        %v587 = vpop.f32.mrf.mxu0
        %v588 = vadd.f32 %v468, %v587
        %589 = vmatmul.f32.gmra.mxu0 %v526
        %v590 = vpop.f32.mrf.mxu0
        %v591 = vadd.f32 %v473, %v590
        %592 = vmatmul.f32.gmra.mxu0 %v529
        %v593 = vpop.f32.mrf.mxu0
        %v594 = vadd.f32 %v478, %v593
        %595 = vmatmul.f32.gmra.mxu0 %v532
        %v596 = vpop.f32.mrf.mxu0
        %v597 = vadd.f32 %v483, %v596
        %598 = vdwg.mxu0
        %599 = vmatpush.msra.mxu0 0.0
        %600 = vmatpush.msra.mxu0 0.0
        %601 = vmatpush.msra.mxu0 0.0
        %602 = vmatpush.msra.mxu0 0.0
        %603 = vmatpush.msra.mxu0 0.0
        %604 = vmatpush.msra.mxu0 0.0
        %605 = vmatpush.msra.mxu0 0.0
        %606 = vmatpush.msra.mxu0 0.0
        %607 = vmatpush.msra.mxu0 0.0
        %608 = vmatpush.msra.mxu0 0.0
        %609 = vmatpush.msra.mxu0 0.0
        %610 = vmatpush.msra.mxu0 0.0
        %611 = vmatpush.msra.mxu0 0.0
        %612 = vmatpush.msra.mxu0 0.0
        %613 = vmatpush.msra.mxu0 0.0
        %614 = vmatpush.msra.mxu0 %v388
        %615 = vmatmul.f32.gmra.mxu0 %v487
        %v616 = vpop.f32.mrf.mxu0
        %v617 = vadd.f32 %v408, %v616
        %618 = vmatmul.f32.gmra.mxu0 %v490
        %v619 = vpop.f32.mrf.mxu0
        %v620 = vadd.f32 %v413, %v619
        %621 = vmatmul.f32.gmra.mxu0 %v493
        %v622 = vpop.f32.mrf.mxu0
        %v623 = vadd.f32 %v418, %v622
        %624 = vmatmul.f32.gmra.mxu0 %v496
        %v625 = vpop.f32.mrf.mxu0
        %v626 = vadd.f32 %v423, %v625
        %627 = vmatmul.f32.gmra.mxu0 %v499
        %v628 = vpop.f32.mrf.mxu0
        %v629 = vadd.f32 %v428, %v628
        %630 = vmatmul.f32.gmra.mxu0 %v502
        %v631 = vpop.f32.mrf.mxu0
        %v632 = vadd.f32 %v433, %v631
        %633 = vmatmul.f32.gmra.mxu0 %v505
        %v634 = vpop.f32.mrf.mxu0
        %v635 = vadd.f32 %v438, %v634
        %636 = vmatmul.f32.gmra.mxu0 %v508
        %v637 = vpop.f32.mrf.mxu0
        %v638 = vadd.f32 %v443, %v637
        %639 = vmatmul.f32.gmra.mxu0 %v511
        %v640 = vpop.f32.mrf.mxu0
        %v641 = vadd.f32 %v448, %v640
        %642 = vmatmul.f32.gmra.mxu0 %v514
        %v643 = vpop.f32.mrf.mxu0
        %v644 = vadd.f32 %v453, %v643
        %645 = vmatmul.f32.gmra.mxu0 %v517
        %v646 = vpop.f32.mrf.mxu0
        %v647 = vadd.f32 %v458, %v646
        %648 = vmatmul.f32.gmra.mxu0 %v520
        %v649 = vpop.f32.mrf.mxu0
        %v650 = vadd.f32 %v463, %v649
        %651 = vmatmul.f32.gmra.mxu0 %v523
        %v652 = vpop.f32.mrf.mxu0
        %v653 = vadd.f32 %v468, %v652
        %654 = vmatmul.f32.gmra.mxu0 %v526
        %v655 = vpop.f32.mrf.mxu0
        %v656 = vadd.f32 %v473, %v655
        %657 = vmatmul.f32.gmra.mxu0 %v529
        %v658 = vpop.f32.mrf.mxu0
        %v659 = vadd.f32 %v478, %v658
        %660 = vmatmul.f32.gmra.mxu0 %v532
        %v661 = vpop.f32.mrf.mxu0
        %v662 = vadd.f32 %v483, %v661
        %663 = vdwg.mxu0
        %v664 = vmax.f32 %v552, 0.0
        %v665 = vmax.f32 %v617, 0.0
        %v666 = vmax.f32 %v555, 0.0
        %v667 = vmax.f32 %v620, 0.0
        %v668 = vmax.f32 %v558, 0.0
        %v669 = vmax.f32 %v623, 0.0
        %v670 = vmax.f32 %v561, 0.0
        %v671 = vmax.f32 %v626, 0.0
        %v672 = vmax.f32 %v564, 0.0
        %v673 = vmax.f32 %v629, 0.0
        %v674 = vmax.f32 %v567, 0.0
        %v675 = vmax.f32 %v632, 0.0
        %v676 = vmax.f32 %v570, 0.0
        %v677 = vmax.f32 %v635, 0.0
        %v678 = vmax.f32 %v573, 0.0
        %v679 = vmax.f32 %v638, 0.0
        %v680 = vmax.f32 %v576, 0.0
        %v681 = vmax.f32 %v641, 0.0
        %v682 = vmax.f32 %v579, 0.0
        %v683 = vmax.f32 %v644, 0.0
        %v684 = vmax.f32 %v582, 0.0
        %v685 = vmax.f32 %v647, 0.0
        %v686 = vmax.f32 %v585, 0.0
        %v687 = vmax.f32 %v650, 0.0
        %v688 = vmax.f32 %v588, 0.0
        %v689 = vmax.f32 %v653, 0.0
        %v690 = vmax.f32 %v591, 0.0
        %v691 = vmax.f32 %v656, 0.0
        %v692 = vmax.f32 %v594, 0.0
        %v693 = vmax.f32 %v659, 0.0
        %v694 = vmax.f32 %v597, 0.0
        %v695 = vmax.f32 %v662, 0.0
        %v696 = vld [vmem:[#allocation8] sm:$0xf]
        %v697 = vld [vmem:[#allocation8 + $0x4] sm:$0xf]
        %v698 = vld [vmem:[#allocation8 + $0x8] sm:$0xf]
        %v699 = vld [vmem:[#allocation8 + $0xc] sm:$0xf]
        %v700 = vld [vmem:[#allocation8 + $0x10] sm:$0xf]
        %v701 = vld [vmem:[#allocation8 + $0x14] sm:$0xf]
        %v702 = vld [vmem:[#allocation8 + $0x18] sm:$0xf]
        %v703 = vld [vmem:[#allocation8 + $0x1c] sm:$0xf]
        %v704 = vld [vmem:[#allocation8 + $0x20] sm:$0xf]
        %v705 = vld [vmem:[#allocation8 + $0x24] sm:$0xf]
        %v706 = vld [vmem:[#allocation8 + $0x28] sm:$0xf]
        %v707 = vld [vmem:[#allocation8 + $0x2c] sm:$0xf]
        %v708 = vld [vmem:[#allocation8 + $0x30] sm:$0xf]
        %v709 = vld [vmem:[#allocation8 + $0x34] sm:$0xf]
        %v710 = vld [vmem:[#allocation8 + $0x38] sm:$0xf]
        %v711 = vld [vmem:[#allocation8 + $0x3c] sm:$0xf]
        %v712 = vpack.c.bf16 %v666, %v664
        %v713 = vpack.c.bf16 %v667, %v665
        %v714 = vpack.c.bf16 %v670, %v668
        %v715 = vpack.c.bf16 %v671, %v669
        %v716 = vpack.c.bf16 %v674, %v672
        %v717 = vpack.c.bf16 %v675, %v673
        %v718 = vpack.c.bf16 %v678, %v676
        %v719 = vpack.c.bf16 %v679, %v677
        %v720 = vpack.c.bf16 %v682, %v680
        %v721 = vpack.c.bf16 %v683, %v681
        %v722 = vpack.c.bf16 %v686, %v684
        %v723 = vpack.c.bf16 %v687, %v685
        %v724 = vpack.c.bf16 %v690, %v688
        %v725 = vpack.c.bf16 %v691, %v689
        %v726 = vpack.c.bf16 %v694, %v692
        %v727 = vpack.c.bf16 %v695, %v693
        %v728 = vld [vmem:[#allocation9] sm:$0xff]
        %v729 = vld [vmem:[#allocation9 + $0x8] sm:$0xff]
        %v730 = vld [vmem:[#allocation9 + $0x10] sm:$0xff]
        %v731 = vld [vmem:[#allocation9 + $0x18] sm:$0xff]
        %v732 = vld [vmem:[#allocation9 + $0x20] sm:$0xff]
        %v733 = vld [vmem:[#allocation9 + $0x28] sm:$0xff]
        %v734 = vld [vmem:[#allocation9 + $0x30] sm:$0xff]
        %v735 = vld [vmem:[#allocation9 + $0x38] sm:$0xff]
        %v736 = vld [vmem:[#allocation9 + $0x40] sm:$0xff]
        %v737 = vld [vmem:[#allocation9 + $0x48] sm:$0xff]
        %v738 = vld [vmem:[#allocation9 + $0x50] sm:$0xff]
        %v739 = vld [vmem:[#allocation9 + $0x58] sm:$0xff]
        %v740 = vld [vmem:[#allocation9 + $0x60] sm:$0xff]
        %v741 = vld [vmem:[#allocation9 + $0x68] sm:$0xff]
        %v742 = vld [vmem:[#allocation9 + $0x70] sm:$0xff]
        %v743 = vld [vmem:[#allocation9 + $0x78] sm:$0xff]
        %745 = vset.pattern.permute.xlu0 0
        %746 = vperm.xlu0 %745, %v728
        %v747 = vpop.permute.xlu0 %746
        %750 = vset.pattern.permute.xlu0 0
        %751 = vperm.xlu0 %750, %v729
        %v752 = vpop.permute.xlu0 %751
        %755 = vset.pattern.permute.xlu0 0
        %756 = vperm.xlu0 %755, %v730
        %v757 = vpop.permute.xlu0 %756
        %760 = vset.pattern.permute.xlu0 0
        %761 = vperm.xlu0 %760, %v731
        %v762 = vpop.permute.xlu0 %761
        %765 = vset.pattern.permute.xlu0 0
        %766 = vperm.xlu0 %765, %v732
        %v767 = vpop.permute.xlu0 %766
        %770 = vset.pattern.permute.xlu0 0
        %771 = vperm.xlu0 %770, %v733
        %v772 = vpop.permute.xlu0 %771
        %775 = vset.pattern.permute.xlu0 0
        %776 = vperm.xlu0 %775, %v734
        %v777 = vpop.permute.xlu0 %776
        %780 = vset.pattern.permute.xlu0 0
        %781 = vperm.xlu0 %780, %v735
        %v782 = vpop.permute.xlu0 %781
        %785 = vset.pattern.permute.xlu0 0
        %786 = vperm.xlu0 %785, %v736
        %v787 = vpop.permute.xlu0 %786
        %790 = vset.pattern.permute.xlu0 0
        %791 = vperm.xlu0 %790, %v737
        %v792 = vpop.permute.xlu0 %791
        %795 = vset.pattern.permute.xlu0 0
        %796 = vperm.xlu0 %795, %v738
        %v797 = vpop.permute.xlu0 %796
        %800 = vset.pattern.permute.xlu0 0
        %801 = vperm.xlu0 %800, %v739
        %v802 = vpop.permute.xlu0 %801
        %805 = vset.pattern.permute.xlu0 0
        %806 = vperm.xlu0 %805, %v740
        %v807 = vpop.permute.xlu0 %806
        %810 = vset.pattern.permute.xlu0 0
        %811 = vperm.xlu0 %810, %v741
        %v812 = vpop.permute.xlu0 %811
        %815 = vset.pattern.permute.xlu0 0
        %816 = vperm.xlu0 %815, %v742
        %v817 = vpop.permute.xlu0 %816
        %820 = vset.pattern.permute.xlu0 0
        %821 = vperm.xlu0 %820, %v743
        %v822 = vpop.permute.xlu0 %821
        %v840 = vunpack.c.l.b16 %v696
        %v841 = vunpack.c.l.b16 %v697
        %v842 = vunpack.c.l.b16 %v698
        %v843 = vunpack.c.l.b16 %v699
        %v844 = vunpack.c.l.b16 %v700
        %v845 = vunpack.c.l.b16 %v701
        %v846 = vunpack.c.l.b16 %v702
        %v847 = vunpack.c.l.b16 %v703
        %v848 = vunpack.c.l.b16 %v704
        %v849 = vunpack.c.l.b16 %v705
        %v850 = vunpack.c.l.b16 %v706
        %v851 = vunpack.c.l.b16 %v707
        %v852 = vunpack.c.l.b16 %v708
        %v853 = vunpack.c.l.b16 %v709
        %v854 = vunpack.c.l.b16 %v710
        %v855 = vunpack.c.l.b16 %v711
        %v856 = vpack.c.b16 %v841, %v840
        %v857 = vpack.c.b16 %v843, %v842
        %v858 = vpack.c.b16 %v845, %v844
        %v859 = vpack.c.b16 %v847, %v846
        %v860 = vpack.c.b16 %v849, %v848
        %v861 = vpack.c.b16 %v851, %v850
        %v862 = vpack.c.b16 %v853, %v852
        %v863 = vpack.c.b16 %v855, %v854
        %872 = vmatpush.bf16.msra.mxu0 %v726
        %873 = vmatpush.bf16.msra.mxu0 %v724
        %874 = vmatpush.bf16.msra.mxu0 %v722
        %875 = vmatpush.bf16.msra.mxu0 %v720
        %876 = vmatpush.bf16.msra.mxu0 %v718
        %877 = vmatpush.bf16.msra.mxu0 %v716
        %878 = vmatpush.bf16.msra.mxu0 %v714
        %879 = vmatpush.bf16.msra.mxu0 %v712
        %880 = vmatmul.bf16.gmra.mxu0 %v856
        %v881 = vpop.f32.mrf.mxu0
        %v882 = vadd.f32 %v747, %v881
        %v883 = vpop.f32.mrf.mxu0
        %v884 = vadd.f32 %v752, %v883
        %885 = vmatmul.bf16.gmra.mxu0 %v857
        %v886 = vpop.f32.mrf.mxu0
        %v887 = vadd.f32 %v757, %v886
        %v888 = vpop.f32.mrf.mxu0
        %v889 = vadd.f32 %v762, %v888
        %890 = vmatmul.bf16.gmra.mxu0 %v858
        %v891 = vpop.f32.mrf.mxu0
        %v892 = vadd.f32 %v767, %v891
        %v893 = vpop.f32.mrf.mxu0
        %v894 = vadd.f32 %v772, %v893
        %895 = vmatmul.bf16.gmra.mxu0 %v859
        %v896 = vpop.f32.mrf.mxu0
        %v897 = vadd.f32 %v777, %v896
        %v898 = vpop.f32.mrf.mxu0
        %v899 = vadd.f32 %v782, %v898
        %900 = vmatmul.bf16.gmra.mxu0 %v860
        %v901 = vpop.f32.mrf.mxu0
        %v902 = vadd.f32 %v787, %v901
        %v903 = vpop.f32.mrf.mxu0
        %v904 = vadd.f32 %v792, %v903
        %905 = vmatmul.bf16.gmra.mxu0 %v861
        %v906 = vpop.f32.mrf.mxu0
        %v907 = vadd.f32 %v797, %v906
        %v908 = vpop.f32.mrf.mxu0
        %v909 = vadd.f32 %v802, %v908
        %910 = vmatmul.bf16.gmra.mxu0 %v862
        %v911 = vpop.f32.mrf.mxu0
        %v912 = vadd.f32 %v807, %v911
        %v913 = vpop.f32.mrf.mxu0
        %v914 = vadd.f32 %v812, %v913
        %915 = vmatmul.bf16.gmra.mxu0 %v863
        %v916 = vpop.f32.mrf.mxu0
        %v917 = vadd.f32 %v817, %v916
        %v918 = vpop.f32.mrf.mxu0
        %v919 = vadd.f32 %v822, %v918
        %920 = vdwg.mxu0
        %921 = vmatpush.bf16.msra.mxu0 %v727
        %922 = vmatpush.bf16.msra.mxu0 %v725
        %923 = vmatpush.bf16.msra.mxu0 %v723
        %924 = vmatpush.bf16.msra.mxu0 %v721
        %925 = vmatpush.bf16.msra.mxu0 %v719
        %926 = vmatpush.bf16.msra.mxu0 %v717
        %927 = vmatpush.bf16.msra.mxu0 %v715
        %928 = vmatpush.bf16.msra.mxu0 %v713
        %929 = vmatmul.bf16.gmra.mxu0 %v856
        %v930 = vpop.f32.mrf.mxu0
        %v931 = vadd.f32 %v747, %v930
        %v932 = vpop.f32.mrf.mxu0
        %v933 = vadd.f32 %v752, %v932
        %934 = vmatmul.bf16.gmra.mxu0 %v857
        %v935 = vpop.f32.mrf.mxu0
        %v936 = vadd.f32 %v757, %v935
        %v937 = vpop.f32.mrf.mxu0
        %v938 = vadd.f32 %v762, %v937
        %939 = vmatmul.bf16.gmra.mxu0 %v858
        %v940 = vpop.f32.mrf.mxu0
        %v941 = vadd.f32 %v767, %v940
        %v942 = vpop.f32.mrf.mxu0
        %v943 = vadd.f32 %v772, %v942
        %944 = vmatmul.bf16.gmra.mxu0 %v859
        %v945 = vpop.f32.mrf.mxu0
        %v946 = vadd.f32 %v777, %v945
        %v947 = vpop.f32.mrf.mxu0
        %v948 = vadd.f32 %v782, %v947
        %949 = vmatmul.bf16.gmra.mxu0 %v860
        %v950 = vpop.f32.mrf.mxu0
        %v951 = vadd.f32 %v787, %v950
        %v952 = vpop.f32.mrf.mxu0
        %v953 = vadd.f32 %v792, %v952
        %954 = vmatmul.bf16.gmra.mxu0 %v861
        %v955 = vpop.f32.mrf.mxu0
        %v956 = vadd.f32 %v797, %v955
        %v957 = vpop.f32.mrf.mxu0
        %v958 = vadd.f32 %v802, %v957
        %959 = vmatmul.bf16.gmra.mxu0 %v862
        %v960 = vpop.f32.mrf.mxu0
        %v961 = vadd.f32 %v807, %v960
        %v962 = vpop.f32.mrf.mxu0
        %v963 = vadd.f32 %v812, %v962
        %964 = vmatmul.bf16.gmra.mxu0 %v863
        %v965 = vpop.f32.mrf.mxu0
        %v966 = vadd.f32 %v817, %v965
        %v967 = vpop.f32.mrf.mxu0
        %v968 = vadd.f32 %v822, %v967
        %969 = vdwg.mxu0
        %v970 = vmax.f32 %v882, 0.0
        %v971 = vmax.f32 %v931, 0.0
        %v972 = vmax.f32 %v884, 0.0
        %v973 = vmax.f32 %v933, 0.0
        %v974 = vmax.f32 %v887, 0.0
        %v975 = vmax.f32 %v936, 0.0
        %v976 = vmax.f32 %v889, 0.0
        %v977 = vmax.f32 %v938, 0.0
        %v978 = vmax.f32 %v892, 0.0
        %v979 = vmax.f32 %v941, 0.0
        %v980 = vmax.f32 %v894, 0.0
        %v981 = vmax.f32 %v943, 0.0
        %v982 = vmax.f32 %v897, 0.0
        %v983 = vmax.f32 %v946, 0.0
        %v984 = vmax.f32 %v899, 0.0
        %v985 = vmax.f32 %v948, 0.0
        %v986 = vmax.f32 %v902, 0.0
        %v987 = vmax.f32 %v951, 0.0
        %v988 = vmax.f32 %v904, 0.0
        %v989 = vmax.f32 %v953, 0.0
        %v990 = vmax.f32 %v907, 0.0
        %v991 = vmax.f32 %v956, 0.0
        %v992 = vmax.f32 %v909, 0.0
        %v993 = vmax.f32 %v958, 0.0
        %v994 = vmax.f32 %v912, 0.0
        %v995 = vmax.f32 %v961, 0.0
        %v996 = vmax.f32 %v914, 0.0
        %v997 = vmax.f32 %v963, 0.0
        %v998 = vmax.f32 %v917, 0.0
        %v999 = vmax.f32 %v966, 0.0
        %v1000 = vmax.f32 %v919, 0.0
        %v1001 = vmax.f32 %v968, 0.0
        %v1002 = vld [vmem:[%s5] sm:$0x1]
        %s1003 = sld [smem:[#allocation2]]
        %v1004 = vstv %s1003
        %1005 = vmatpush.msra.mxu0 %v1000
        %1006 = vmatpush.msra.mxu0 %v998
        %1007 = vmatpush.msra.mxu0 %v996
        %1008 = vmatpush.msra.mxu0 %v994
        %1009 = vmatpush.msra.mxu0 %v992
        %1010 = vmatpush.msra.mxu0 %v990
        %1011 = vmatpush.msra.mxu0 %v988
        %1012 = vmatpush.msra.mxu0 %v986
        %1013 = vmatpush.msra.mxu0 %v984
        %1014 = vmatpush.msra.mxu0 %v982
        %1015 = vmatpush.msra.mxu0 %v980
        %1016 = vmatpush.msra.mxu0 %v978
        %1017 = vmatpush.msra.mxu0 %v976
        %1018 = vmatpush.msra.mxu0 %v974
        %1019 = vmatpush.msra.mxu0 %v972
        %1020 = vmatpush.msra.mxu0 %v970
        %1021 = vmatmul.f32.gmra.mxu0 %v1002
        %v1022 = vpop.f32.mrf.mxu0
        %v1023 = vadd.f32 %v1004, %v1022
        %1024 = vdwg.mxu0
        %1025 = vmatpush.msra.mxu0 %v1001
        %1026 = vmatpush.msra.mxu0 %v999
        %1027 = vmatpush.msra.mxu0 %v997
        %1028 = vmatpush.msra.mxu0 %v995
        %1029 = vmatpush.msra.mxu0 %v993
        %1030 = vmatpush.msra.mxu0 %v991
        %1031 = vmatpush.msra.mxu0 %v989
        %1032 = vmatpush.msra.mxu0 %v987
        %1033 = vmatpush.msra.mxu0 %v985
        %1034 = vmatpush.msra.mxu0 %v983
        %1035 = vmatpush.msra.mxu0 %v981
        %1036 = vmatpush.msra.mxu0 %v979
        %1037 = vmatpush.msra.mxu0 %v977
        %1038 = vmatpush.msra.mxu0 %v975
        %1039 = vmatpush.msra.mxu0 %v973
        %1040 = vmatpush.msra.mxu0 %v971
        %1041 = vmatmul.f32.gmra.mxu0 %v1002
        %v1042 = vpop.f32.mrf.mxu0
        %v1043 = vadd.f32 %v1004, %v1042
        %1044 = vdwg.mxu0
        %v1045 = vtanh.pop %v1023
        %v1046 = vtanh.pop %v1043
        %v1047 = vmul.f32 %v1045, 2.0
        %v1048 = vmul.f32 %v1046, 2.0
        %v1051 = vrot.slane %v1048, 7
        %vm1052 = vcmask 1040384
        %v1053 = vsel %vm1052, %v1047, %v1051
        %v1055 = vlaneseq
        %vm1056 = vcmp.ge.s32.totalorder %v1055, 0
        %vm1057 = vcmp.lt.s32.totalorder %v1055, 256
        %vm1058 = vmand %vm1056, %vm1057
        %1059 = vst.msk [vmem:[%s352] sm:$0x3] %vm1058, %v1053
        %s1060 = sand.u32 %s185, 1
        %s1061 = scalar_lea.sflag [#allocation5], %s1060
        %s1062 = sand.u32 %s185, 1
        %s1063 = smul.addr %s1062, 2
        %s1064 = scalar_lea.vmem [#allocation11], %s1063
        // Predicated region
        $region65: #{_lambda_.1} parent=47 // pred_check
          %p1065 = pneg %p195
        $region66: #{_lambda_.1} parent=47 // pred_check_branch
          %1067 = sbr.rel (%p1065) target = $region68
        $region67: #{_lambda_.1} parent=47 // pred_region
          %s1068 = smul.u32 2, %s25
          %s1069 = ssub.s32 3, %s1068
          %p1070 = scmp.lt.s32.totalorder %s1069, 2
          %s1071 = scalar_select %p1070, %s1069, 2
          %s1072 = ssub.s32 2, %s1071
          %s1073 = sshll.u32 %s1072, 4
          %1074 = vsyncadd %s1061, %s1073
          %p1075 = scmp.ne.s32.totalorder 0, %s1071
          %s1076 = scalar_lea.hbm %s7, %s1068
          %s1077 = sshll.u32 %s1071, 4
          %s1078 = sshll.u32 %s1064, 4
          %s1079 = int_to_ptr.vmem [resolvable:$true] %s1078
          %s1080 = sshll.u32 %s1076, 4
          %s1081 = int_to_ptr.hbm [resolvable:$true] %s1080
          %1083 = dma.vmem_to_hbm [thread:$0]  (%p1075), %s1079, %s1077, %s1081, %s1061
        $region68: #{_lambda_.1} parent=47 // pred_fallthru
          _
      $region48: #{_lambda_.1} parent=5 // pred_fallthru
        _
      %p1084 = scmp.le.s32.totalorder 2, %s20
      // Predicated region
      $region69: #{_lambda_.1} parent=5 // pred_check
        %p1085 = pneg %p1084
      $region70: #{_lambda_.1} parent=5 // pred_check_branch
        %1087 = sbr.rel (%p1085) target = $region72
      $region71: #{_lambda_.1} parent=5 // pred_region
        %s1088 = ssub.s32 %s20, 2
        // Predicated region
        $region73: #{_lambda_.1} parent=71 // pred_check
          %p1089 = pneg %p201
        $region74: #{_lambda_.1} parent=71 // pred_check_branch
          %1091 = sbr.rel (%p1089) target = $region76
        $region75: #{_lambda_.1} parent=71 // pred_region
          %s1092 = sand.u32 %s186, 1
          %s1093 = scalar_lea.sflag [#allocation5], %s1092
          %s1094 = sand.u32 %s186, 1
          %s1095 = smul.addr %s1094, 2
          %s1096 = scalar_lea.vmem [#allocation11], %s1095
          %1098 = dma.done %s1093, 32
        $region76: #{_lambda_.1} parent=71 // pred_fallthru
          _
      $region72: #{_lambda_.1} parent=5 // pred_fallthru
        _
    $region6: #{_lambda_.1} parent=1 // loop_footer
      %s24 = sadd.s32 1, %s20
    $region7: #{_lambda_.1} parent=1 // loop_footer_branch
      %19 = sbr.rel target = $region3
    $region8: #{_lambda_.1} parent=1 // loop_exit
      _
    %1099 = vsyncpa [#allocation4], 1
    %s1100 = scalar_lea.sflag [#allocation4], 1
    %1101 = vsyncpa %s1100, 1
    %1102 = vsyncpa [#allocation7], 1
    %1103 = vsyncpa [#allocation10], 1
    %1104 = vsyncpa [#allocation5], 1
    %s1105 = scalar_lea.sflag [#allocation5], 1
    %1106 = vsyncpa %s1105, 1

</llo_original>
